<compile_context>
chip_gen: v7x
topology: tpu7x:2x2x1
jax: 0.10.0
libtpu: 0.0.40
codegen_flags: <defaults>
</compile_context>

<pallas_src>
import functools

import jax
import jax.numpy as jnp
from jax.experimental import pallas as pl
from jax.experimental.pallas import tpu as pltpu

# Architecture implied by EchoNet.__init__: layer_info = cat(input, hidden, output)
IN_DIM = 3
HIDDEN = (32, 32)
OUT_DIM = 1
LAYER_SIZES = (IN_DIM,) + HIDDEN + (OUT_DIM,)

DEFAULT_TM = 4096  # collocation points per grid step (lane dimension)


def _echonet_kernel(t_ref, x_ref, y_ref,
                    w0_ref, b0_ref, w1_ref, b1_ref, w2_ref, b2_ref,
                    o_ref, *, acts_dtype):
    """One lane-tile of the MLP.  t/x/y tiles are (1, TM); output is (1, TM)."""
    t = t_ref[...]
    x = x_ref[...]
    y = y_ref[...]

    # Layer 0 (in_dim = 3): three broadcast FMAs on the VPU.  A K=3 matmul
    # would leave the MXU <2% utilized and pay its result-FIFO latency for
    # essentially no work.
    w0 = w0_ref[...]                                       # (H0, 3)
    h = jnp.tanh(w0[:, 0:1] * t + w0[:, 1:2] * x + w0[:, 2:3] * y + b0_ref[...])
    h = h.astype(acts_dtype)                               # (H0, TM), lane-dense

    # Layer 1: (H1, H0) @ (H0, TM) on the MXU, f32 accumulation.
    h = jnp.tanh(
        jnp.dot(w1_ref[...].astype(acts_dtype), h,
                preferred_element_type=jnp.float32) + b1_ref[...]
    ).astype(acts_dtype)                                   # (H1, TM)

    # Layer 2 (out_dim = 1): (1, H1) @ (H1, TM) -> (1, TM), lane-dense output.
    u = jnp.tanh(
        jnp.dot(w2_ref[...].astype(acts_dtype), h,
                preferred_element_type=jnp.float32) + b2_ref[...]
    )
    o_ref[...] = u.astype(o_ref.dtype)


def echonet_forward(t, x, y, params, *, tm=DEFAULT_TM, acts_dtype=jnp.float32):
    """t, x, y: (N, 1) float32.  params: list of (W, b) with W:(out, in), b:(out, 1).

    Returns (N, 1) float32, matching the PyTorch forward.
    """
    n = t.shape[0]

    # (N, 1) -> (1, N): batch on the lane axis.  Contiguous data => free reshape.
    t_row = t.reshape(1, n)
    x_row = x.reshape(1, n)
    y_row = y.reshape(1, n)

    # Lane-tile size: a multiple of 128, no larger than the lane-padded problem.
    tm = max(128, min(int(tm), pl.cdiv(n, 128) * 128))
    tm = (tm // 128) * 128
    n_pad = pl.cdiv(n, tm) * tm
    if n_pad != n:
        pad = ((0, 0), (0, n_pad - n))
        t_row = jnp.pad(t_row, pad)
        x_row = jnp.pad(x_row, pad)
        y_row = jnp.pad(y_row, pad)

    (w0, b0), (w1, b1), (w2, b2) = params

    def param_spec(arr):
        # Small parameter arrays: whole array resident in VMEM every grid step.
        return pl.BlockSpec(arr.shape, lambda i: (0,) * arr.ndim)

    def lane_spec():
        return pl.BlockSpec((1, tm), lambda i: (0, i))

    h0, h1 = HIDDEN
    param_bytes = sum(w.size + b.size for w, b in params) * 4
    cost = pl.CostEstimate(
        flops=2 * n * (IN_DIM * h0 + h0 * h1 + h1 * OUT_DIM),
        transcendentals=n * (h0 + h1 + OUT_DIM),
        bytes_accessed=4 * n * (IN_DIM + OUT_DIM) + param_bytes,
    )

    kernel = functools.partial(_echonet_kernel, acts_dtype=acts_dtype)

    u_row = pl.pallas_call(
        kernel,
        out_shape=jax.ShapeDtypeStruct((1, n_pad), jnp.float32),
        grid_spec=pltpu.PrefetchScalarGridSpec(
            num_scalar_prefetch=0,
            grid=(n_pad // tm,),
            in_specs=[
                lane_spec(), lane_spec(), lane_spec(),
                param_spec(w0), param_spec(b0),
                param_spec(w1), param_spec(b1),
                param_spec(w2), param_spec(b2),
            ],
            out_specs=lane_spec(),
        ),
        compiler_params=pltpu.CompilerParams(
            dimension_semantics=("parallel",),
        ),
        cost_estimate=cost,
    )(t_row, x_row, y_row, w0, b0, w1, b1, w2, b2)

    # (1, n_pad) -> (N, 1), dropping the lane padding.  Free reshape.
    return u_row[:, :n].reshape(n, OUT_DIM)


def init_params(key, layer_sizes):
    """torch.nn.Linear-style init U(-1/sqrt(fan_in), +1/sqrt(fan_in)).

    W is stored (out, in) exactly like torch; b is stored (out, 1)."""
    params = []
    for fan_in, fan_out in zip(layer_sizes[:-1], layer_sizes[1:]):
        key, kw, kb = jax.random.split(key, 3)
        bound = 1.0 / float(fan_in) ** 0.5
        w = jax.random.uniform(kw, (fan_out, fan_in), jnp.float32, -bound, bound)
        b = jax.random.uniform(kb, (fan_out, 1), jnp.float32, -bound, bound)
        params.append((w, b))
    return params


def echonet_reference(t, x, y, params):
    """Pure-JAX reference matching the PyTorch forward."""
    h = jnp.concatenate([t, x, y], axis=1)        # (N, 3)
    for w, b in params:
        h = jnp.tanh(h @ w.T + b.T)               # torch Linear: x W^T + b
    return h


if __name__ == "__main__":
    key = jax.random.PRNGKey(0)
    k_t, k_x, k_y, k_p = jax.random.split(key, 4)

    N = 256  # number of (t, x, y) collocation points
    t = jax.random.normal(k_t, (N, 1), jnp.float32)
    x = jax.random.normal(k_x, (N, 1), jnp.float32)
    y = jax.random.normal(k_y, (N, 1), jnp.float32)

    params = init_params(k_p, LAYER_SIZES)

    u = echonet_forward(t, x, y, params)
    u = jax.block_until_ready(u)

    u_ref = echonet_reference(t, x, y, params)
    assert u.shape == (N, OUT_DIM)
    assert jnp.allclose(u, u_ref, atol=1e-5, rtol=1e-5), float(
        jnp.max(jnp.abs(u - u_ref)))

    print("KERNEL_OK")
</pallas_src>

<mosaic_0001>
module attributes {stable_mosaic.version = 11 : i64} {
  func.func @_echonet_kernel(%arg0: i32, %arg1: memref<1x256xf32, #tpu.memory_space<vmem>>, %arg2: memref<1x256xf32, #tpu.memory_space<vmem>>, %arg3: memref<1x256xf32, #tpu.memory_space<vmem>>, %arg4: memref<32x3xf32, #tpu.memory_space<vmem>>, %arg5: memref<32x1xf32, #tpu.memory_space<vmem>>, %arg6: memref<32x32xf32, #tpu.memory_space<vmem>>, %arg7: memref<32x1xf32, #tpu.memory_space<vmem>>, %arg8: memref<1x32xf32, #tpu.memory_space<vmem>>, %arg9: memref<1x1xf32, #tpu.memory_space<vmem>>, %arg10: memref<1x256xf32, #tpu.memory_space<vmem>>) attributes {dimension_semantics = [#tpu.dimension_semantics<parallel>], iteration_bounds = array<i64: 1>, scalar_prefetch = 0 : i64, scratch_operands = 0 : i64, tpu.core_type = #tpu.core_type<tc>, window_params = [{transform_indices = @transform_0, window_bounds = array<i64: 1, 256>}, {transform_indices = @transform_1, window_bounds = array<i64: 1, 256>}, {transform_indices = @transform_2, window_bounds = array<i64: 1, 256>}, {pipeline_mode = #tpu.pipeline_mode<synchronous>, transform_indices = @transform_3, window_bounds = array<i64: 32, 3>}, {pipeline_mode = #tpu.pipeline_mode<synchronous>, transform_indices = @transform_4, window_bounds = array<i64: 32, 1>}, {pipeline_mode = #tpu.pipeline_mode<synchronous>, transform_indices = @transform_5, window_bounds = array<i64: 32, 32>}, {pipeline_mode = #tpu.pipeline_mode<synchronous>, transform_indices = @transform_6, window_bounds = array<i64: 32, 1>}, {pipeline_mode = #tpu.pipeline_mode<synchronous>, transform_indices = @transform_7, window_bounds = array<i64: 1, 32>}, {pipeline_mode = #tpu.pipeline_mode<synchronous>, transform_indices = @transform_8, window_bounds = array<i64: 1, 1>}, {transform_indices = @transform_9, window_bounds = array<i64: 1, 256>}]} {
    %c0 = arith.constant 0 : index
    %c0_0 = arith.constant 0 : index
    %0 = vector.load %arg1[%c0, %c0_0] : memref<1x256xf32, #tpu.memory_space<vmem>>, vector<1x256xf32>
    %c0_1 = arith.constant 0 : index
    %c0_2 = arith.constant 0 : index
    %1 = vector.load %arg2[%c0_1, %c0_2] : memref<1x256xf32, #tpu.memory_space<vmem>>, vector<1x256xf32>
    %c0_3 = arith.constant 0 : index
    %c0_4 = arith.constant 0 : index
    %2 = vector.load %arg3[%c0_3, %c0_4] : memref<1x256xf32, #tpu.memory_space<vmem>>, vector<1x256xf32>
    %c0_5 = arith.constant 0 : index
    %c0_6 = arith.constant 0 : index
    %3 = vector.load %arg4[%c0_5, %c0_6] : memref<32x3xf32, #tpu.memory_space<vmem>>, vector<32x3xf32>
    %4 = vector.extract_strided_slice %3 {offsets = [0, 0], sizes = [32, 1], strides = [1, 1]} : vector<32x3xf32> to vector<32x1xf32>
    %5 = vector.broadcast %4 : vector<32x1xf32> to vector<32x256xf32>
    %6 = vector.broadcast %0 : vector<1x256xf32> to vector<32x256xf32>
    %7 = arith.mulf %5, %6 : vector<32x256xf32>
    %8 = vector.extract_strided_slice %3 {offsets = [0, 1], sizes = [32, 1], strides = [1, 1]} : vector<32x3xf32> to vector<32x1xf32>
    %9 = vector.broadcast %8 : vector<32x1xf32> to vector<32x256xf32>
    %10 = vector.broadcast %1 : vector<1x256xf32> to vector<32x256xf32>
    %11 = arith.mulf %9, %10 : vector<32x256xf32>
    %12 = arith.addf %7, %11 : vector<32x256xf32>
    %13 = vector.extract_strided_slice %3 {offsets = [0, 2], sizes = [32, 1], strides = [1, 1]} : vector<32x3xf32> to vector<32x1xf32>
    %14 = vector.broadcast %13 : vector<32x1xf32> to vector<32x256xf32>
    %15 = vector.broadcast %2 : vector<1x256xf32> to vector<32x256xf32>
    %16 = arith.mulf %14, %15 : vector<32x256xf32>
    %17 = arith.addf %12, %16 : vector<32x256xf32>
    %c0_7 = arith.constant 0 : index
    %c0_8 = arith.constant 0 : index
    %18 = vector.load %arg5[%c0_7, %c0_8] : memref<32x1xf32, #tpu.memory_space<vmem>>, vector<32x1xf32>
    %19 = vector.broadcast %18 : vector<32x1xf32> to vector<32x256xf32>
    %20 = arith.addf %17, %19 : vector<32x256xf32>
    %21 = math.tanh %20 : vector<32x256xf32>
    %c0_9 = arith.constant 0 : index
    %c0_10 = arith.constant 0 : index
    %22 = vector.load %arg6[%c0_9, %c0_10] : memref<32x32xf32, #tpu.memory_space<vmem>>, vector<32x32xf32>
    %cst = arith.constant dense<0.000000e+00> : vector<32x256xf32>
    %23 = tpu.matmul %22, %21, %cst {dimension_numbers = #tpu.dot_dimension_numbers<[1], [0], [0], [1], [0, 0, 1, 1], [], []>} : vector<32x32xf32>, vector<32x256xf32>, vector<32x256xf32> -> vector<32x256xf32>
    %c0_11 = arith.constant 0 : index
    %c0_12 = arith.constant 0 : index
    %24 = vector.load %arg7[%c0_11, %c0_12] : memref<32x1xf32, #tpu.memory_space<vmem>>, vector<32x1xf32>
    %25 = vector.broadcast %24 : vector<32x1xf32> to vector<32x256xf32>
    %26 = arith.addf %23, %25 : vector<32x256xf32>
    %27 = math.tanh %26 : vector<32x256xf32>
    %c0_13 = arith.constant 0 : index
    %c0_14 = arith.constant 0 : index
    %28 = vector.load %arg8[%c0_13, %c0_14] : memref<1x32xf32, #tpu.memory_space<vmem>>, vector<1x32xf32>
    %cst_15 = arith.constant dense<0.000000e+00> : vector<1x256xf32>
    %29 = tpu.matmul %28, %27, %cst_15 {dimension_numbers = #tpu.dot_dimension_numbers<[1], [0], [0], [1], [0, 0, 1, 1], [], []>} : vector<1x32xf32>, vector<32x256xf32>, vector<1x256xf32> -> vector<1x256xf32>
    %c0_16 = arith.constant 0 : index
    %c0_17 = arith.constant 0 : index
    %30 = vector.load %arg9[%c0_16, %c0_17] : memref<1x1xf32, #tpu.memory_space<vmem>>, vector<1x1xf32>
    %31 = vector.broadcast %30 : vector<1x1xf32> to vector<1x256xf32>
    %32 = arith.addf %29, %31 : vector<1x256xf32>
    %33 = math.tanh %32 : vector<1x256xf32>
    %c0_18 = arith.constant 0 : index
    %c0_19 = arith.constant 0 : index
    %34 = vector.load %arg10[%c0_18, %c0_19] : memref<1x256xf32, #tpu.memory_space<vmem>>, vector<1x256xf32>
    tpu.vector_store %arg10[%c0_18, %c0_19], %33 {strides = array<i32>} : memref<1x256xf32, #tpu.memory_space<vmem>>, vector<1x256xf32>,
    return
  }
  func.func @transform_0(%arg0: i32) -> (i32, i32) {
    %c0_i32 = arith.constant 0 : i32
    %c0_i32_0 = arith.constant 0 : i32
    return %c0_i32, %arg0 : i32, i32
  }
  func.func @transform_1(%arg0: i32) -> (i32, i32) {
    %c0_i32 = arith.constant 0 : i32
    %c0_i32_0 = arith.constant 0 : i32
    return %c0_i32, %arg0 : i32, i32
  }
  func.func @transform_2(%arg0: i32) -> (i32, i32) {
    %c0_i32 = arith.constant 0 : i32
    %c0_i32_0 = arith.constant 0 : i32
    return %c0_i32, %arg0 : i32, i32
  }
  func.func @transform_3(%arg0: i32) -> (i32, i32) {
    %c0_i32 = arith.constant 0 : i32
    %c0_i32_0 = arith.constant 0 : i32
    %c0_i32_1 = arith.constant 0 : i32
    return %c0_i32, %c0_i32_0 : i32, i32
  }
  func.func @transform_4(%arg0: i32) -> (i32, i32) {
    %c0_i32 = arith.constant 0 : i32
    %c0_i32_0 = arith.constant 0 : i32
    %c0_i32_1 = arith.constant 0 : i32
    return %c0_i32, %c0_i32_0 : i32, i32
  }
  func.func @transform_5(%arg0: i32) -> (i32, i32) {
    %c0_i32 = arith.constant 0 : i32
    %c0_i32_0 = arith.constant 0 : i32
    %c0_i32_1 = arith.constant 0 : i32
    return %c0_i32, %c0_i32_0 : i32, i32
  }
  func.func @transform_6(%arg0: i32) -> (i32, i32) {
    %c0_i32 = arith.constant 0 : i32
    %c0_i32_0 = arith.constant 0 : i32
    %c0_i32_1 = arith.constant 0 : i32
    return %c0_i32, %c0_i32_0 : i32, i32
  }
  func.func @transform_7(%arg0: i32) -> (i32, i32) {
    %c0_i32 = arith.constant 0 : i32
    %c0_i32_0 = arith.constant 0 : i32
    %c0_i32_1 = arith.constant 0 : i32
    return %c0_i32, %c0_i32_0 : i32, i32
  }
  func.func @transform_8(%arg0: i32) -> (i32, i32) {
    %c0_i32 = arith.constant 0 : i32
    %c0_i32_0 = arith.constant 0 : i32
    %c0_i32_1 = arith.constant 0 : i32
    return %c0_i32, %c0_i32_0 : i32, i32
  }
  func.func @transform_9(%arg0: i32) -> (i32, i32) {
    %c0_i32 = arith.constant 0 : i32
    %c0_i32_0 = arith.constant 0 : i32
    return %c0_i32, %arg0 : i32, i32
  }
}

</mosaic_0001>

<llo_original>
// kernel: tpu_custom_call.1
$region0: #{tpu_custom_call.1}
  #allocation0 [shape = 'u32[]', space=smem, size = 0x4, offset = 0x4, fixed_abs, tag = 'smem constant byte address 0x4 - core index']
  #allocation1 [shape = 'u32[144,128]{1,0:T(1,128)}', space=vmem, size = 0x12000, scoped, tag = 'internal scratch']
  #allocation2 [shape = 'f32[1,1]{1,0:T(1,128)S(1)}', space=vmem, size = 0x200, scoped, tag = 'scoped memory for tpu_custom_call.1']
  %s0 = inlined_call_operand.vmem [shape: f32[1,256], index: 0, kind: input, shape index: {}]
  %s1 = inlined_call_operand.vmem [shape: f32[1,256], index: 1, kind: input, shape index: {}]
  %s2 = inlined_call_operand.vmem [shape: f32[1,256], index: 2, kind: input, shape index: {}]
  %s3 = inlined_call_operand.vmem [shape: f32[32,3], index: 3, kind: input, shape index: {}]
  %s4 = inlined_call_operand.vmem [shape: f32[32,1], index: 4, kind: input, shape index: {}]
  %s5 = inlined_call_operand.vmem [shape: f32[32,32], index: 5, kind: input, shape index: {}]
  %s6 = inlined_call_operand.vmem [shape: f32[32,1], index: 6, kind: input, shape index: {}]
  %s7 = inlined_call_operand.vmem [shape: f32[1,32], index: 7, kind: input, shape index: {}]
  %s8 = inlined_call_operand.<no memory space> [shape: f32[1,1], index: 8, kind: input, shape index: {}]
  %s9 = inlined_call_operand.hbm [shape: f32[1,256], index: 9, kind: output, shape index: {}]
  %s10 = sld [smem:[#allocation0]]
  $region46: #{tpu_custom_call.1} parent=0
    _
  %s12 = ssub.s32 1, %s10
  %s13 = scalar_select 0, %s12, %s10
  %v14 = vstv %s8
  %15 = vst [vmem:[#allocation2] sm:$0x1] %v14
  $region1: #{tpu_custom_call.1} parent=0
    #allocation3 [shape = 'u8[1024]{0}', space=vmem, size = 0x400, scoped, tag = 'output window, operand 0, single buffered']
    #allocation4 [shape = 's32[1]{0}', space=sflag, size = 0x4, scoped, tag = 'scoped memory for tpu_custom_call.1']
    %16 = vsyncpa [#allocation4], 0
    // Predicated region
    $region2: #{tpu_custom_call.1} parent=1 // pred_check
      _
    $region3: #{tpu_custom_call.1} parent=1 // pred_check_branch
      %18 = sbr.rel (0) target = $region5
    $region4: #{tpu_custom_call.1} parent=1 // pred_region
      _
    $region5: #{tpu_custom_call.1} parent=1 // pred_fallthru
      _
    // Predicated region
    $region6: #{tpu_custom_call.1} parent=1 // pred_check
      _
    $region7: #{tpu_custom_call.1} parent=1 // pred_check_branch
      %20 = sbr.rel (0) target = $region9
    $region8: #{tpu_custom_call.1} parent=1 // pred_region
      _
    $region9: #{tpu_custom_call.1} parent=1 // pred_fallthru
      _
    // Predicated region
    $region10: #{tpu_custom_call.1} parent=1 // pred_check
      _
    $region11: #{tpu_custom_call.1} parent=1 // pred_check_branch
      %22 = sbr.rel (0) target = $region13
    $region12: #{tpu_custom_call.1} parent=1 // pred_region
      _
    $region13: #{tpu_custom_call.1} parent=1 // pred_fallthru
      _
    // Predicated region
    $region14: #{tpu_custom_call.1} parent=1 // pred_check
      _
    $region15: #{tpu_custom_call.1} parent=1 // pred_check_branch
      %24 = sbr.rel (0) target = $region17
    $region16: #{tpu_custom_call.1} parent=1 // pred_region
      _
    $region17: #{tpu_custom_call.1} parent=1 // pred_fallthru
      _
    // Predicated region
    $region18: #{tpu_custom_call.1} parent=1 // pred_check
      _
    $region19: #{tpu_custom_call.1} parent=1 // pred_check_branch
      %26 = sbr.rel (0) target = $region21
    $region20: #{tpu_custom_call.1} parent=1 // pred_region
      _
    $region21: #{tpu_custom_call.1} parent=1 // pred_fallthru
      _
    // Predicated region
    $region22: #{tpu_custom_call.1} parent=1 // pred_check
      _
    $region23: #{tpu_custom_call.1} parent=1 // pred_check_branch
      %28 = sbr.rel (0) target = $region25
    $region24: #{tpu_custom_call.1} parent=1 // pred_region
      _
    $region25: #{tpu_custom_call.1} parent=1 // pred_fallthru
      _
    // Predicated region
    $region26: #{tpu_custom_call.1} parent=1 // pred_check
      _
    $region27: #{tpu_custom_call.1} parent=1 // pred_check_branch
      %30 = sbr.rel (0) target = $region29
    $region28: #{tpu_custom_call.1} parent=1 // pred_region
      _
    $region29: #{tpu_custom_call.1} parent=1 // pred_fallthru
      _
    // Predicated region
    $region30: #{tpu_custom_call.1} parent=1 // pred_check
      _
    $region31: #{tpu_custom_call.1} parent=1 // pred_check_branch
      %32 = sbr.rel (0) target = $region33
    $region32: #{tpu_custom_call.1} parent=1 // pred_region
      _
    $region33: #{tpu_custom_call.1} parent=1 // pred_fallthru
      _
    // Predicated region
    $region34: #{tpu_custom_call.1} parent=1 // pred_check
      _
    $region35: #{tpu_custom_call.1} parent=1 // pred_check_branch
      %34 = sbr.rel (0) target = $region37
    $region36: #{tpu_custom_call.1} parent=1 // pred_region
      _
    $region37: #{tpu_custom_call.1} parent=1 // pred_fallthru
      _
    %v35 = vld [vmem:[%s0] sm:$0x3]
    %v36 = vld [vmem:[%s1] sm:$0x3]
    %v37 = vld [vmem:[%s2] sm:$0x3]
    %v38 = vld [vmem:[%s3] sm:$0xff]
    %v39 = vld [vmem:[%s3 + $0x8] sm:$0xff]
    %v40 = vld [vmem:[%s3 + $0x10] sm:$0xff]
    %v41 = vld [vmem:[%s3 + $0x18] sm:$0xff]
    %43 = vset.pattern.permute.xlu0 0
    %44 = vperm.xlu0 %43, %v38
    %v45 = vpop.permute.xlu0 %44
    %48 = vset.pattern.permute.xlu0 0
    %49 = vperm.xlu0 %48, %v39
    %v50 = vpop.permute.xlu0 %49
    %53 = vset.pattern.permute.xlu0 0
    %54 = vperm.xlu0 %53, %v40
    %v55 = vpop.permute.xlu0 %54
    %58 = vset.pattern.permute.xlu0 0
    %59 = vperm.xlu0 %58, %v41
    %v60 = vpop.permute.xlu0 %59
    %v63 = vlaneseq
    %v64 = vshrl.u32 %v63, 7
    %v65 = vsub.s32 0, %v64
    %v66 = vrot.slane %v35, %v65
    %v67 = vlaneseq
    %v68 = vshrl.u32 %v67, 7
    %v69 = vsub.s32 1, %v68
    %v70 = vrot.slane %v35, %v69
    %v73 = vmul.f32 %v45, %v66
    %v74 = vmul.f32 %v45, %v70
    %v75 = vmul.f32 %v50, %v66
    %v76 = vmul.f32 %v50, %v70
    %v77 = vmul.f32 %v55, %v66
    %v78 = vmul.f32 %v55, %v70
    %v79 = vmul.f32 %v60, %v66
    %v80 = vmul.f32 %v60, %v70
    %81 = vset.pattern.permute.xlu0 1
    %82 = vperm.xlu0 %81, %v38
    %v83 = vpop.permute.xlu0 %82
    %85 = vset.pattern.permute.xlu0 1
    %86 = vperm.xlu0 %85, %v39
    %v87 = vpop.permute.xlu0 %86
    %89 = vset.pattern.permute.xlu0 1
    %90 = vperm.xlu0 %89, %v40
    %v91 = vpop.permute.xlu0 %90
    %93 = vset.pattern.permute.xlu0 1
    %94 = vperm.xlu0 %93, %v41
    %v95 = vpop.permute.xlu0 %94
    %v98 = vlaneseq
    %v99 = vshrl.u32 %v98, 7
    %v100 = vsub.s32 0, %v99
    %v101 = vrot.slane %v36, %v100
    %v102 = vlaneseq
    %v103 = vshrl.u32 %v102, 7
    %v104 = vsub.s32 1, %v103
    %v105 = vrot.slane %v36, %v104
    %v108 = vmul.f32 %v83, %v101
    %v109 = vmul.f32 %v83, %v105
    %v110 = vmul.f32 %v87, %v101
    %v111 = vmul.f32 %v87, %v105
    %v112 = vmul.f32 %v91, %v101
    %v113 = vmul.f32 %v91, %v105
    %v114 = vmul.f32 %v95, %v101
    %v115 = vmul.f32 %v95, %v105
    %v116 = vadd.f32 %v73, %v108
    %v117 = vadd.f32 %v74, %v109
    %v118 = vadd.f32 %v75, %v110
    %v119 = vadd.f32 %v76, %v111
    %v120 = vadd.f32 %v77, %v112
    %v121 = vadd.f32 %v78, %v113
    %v122 = vadd.f32 %v79, %v114
    %v123 = vadd.f32 %v80, %v115
    %124 = vset.pattern.permute.xlu0 2
    %125 = vperm.xlu0 %124, %v38
    %v126 = vpop.permute.xlu0 %125
    %128 = vset.pattern.permute.xlu0 2
    %129 = vperm.xlu0 %128, %v39
    %v130 = vpop.permute.xlu0 %129
    %132 = vset.pattern.permute.xlu0 2
    %133 = vperm.xlu0 %132, %v40
    %v134 = vpop.permute.xlu0 %133
    %136 = vset.pattern.permute.xlu0 2
    %137 = vperm.xlu0 %136, %v41
    %v138 = vpop.permute.xlu0 %137
    %v141 = vlaneseq
    %v142 = vshrl.u32 %v141, 7
    %v143 = vsub.s32 0, %v142
    %v144 = vrot.slane %v37, %v143
    %v145 = vlaneseq
    %v146 = vshrl.u32 %v145, 7
    %v147 = vsub.s32 1, %v146
    %v148 = vrot.slane %v37, %v147
    %v151 = vmul.f32 %v126, %v144
    %v152 = vmul.f32 %v126, %v148
    %v153 = vmul.f32 %v130, %v144
    %v154 = vmul.f32 %v130, %v148
    %v155 = vmul.f32 %v134, %v144
    %v156 = vmul.f32 %v134, %v148
    %v157 = vmul.f32 %v138, %v144
    %v158 = vmul.f32 %v138, %v148
    %v159 = vadd.f32 %v116, %v151
    %v160 = vadd.f32 %v117, %v152
    %v161 = vadd.f32 %v118, %v153
    %v162 = vadd.f32 %v119, %v154
    %v163 = vadd.f32 %v120, %v155
    %v164 = vadd.f32 %v121, %v156
    %v165 = vadd.f32 %v122, %v157
    %v166 = vadd.f32 %v123, %v158
    %v167 = vld [vmem:[%s4] sm:$0xff]
    %v168 = vld [vmem:[%s4 + $0x8] sm:$0xff]
    %v169 = vld [vmem:[%s4 + $0x10] sm:$0xff]
    %v170 = vld [vmem:[%s4 + $0x18] sm:$0xff]
    %172 = vset.pattern.permute.xlu0 0
    %173 = vperm.xlu0 %172, %v167
    %v174 = vpop.permute.xlu0 %173
    %177 = vset.pattern.permute.xlu0 0
    %178 = vperm.xlu0 %177, %v168
    %v179 = vpop.permute.xlu0 %178
    %182 = vset.pattern.permute.xlu0 0
    %183 = vperm.xlu0 %182, %v169
    %v184 = vpop.permute.xlu0 %183
    %187 = vset.pattern.permute.xlu0 0
    %188 = vperm.xlu0 %187, %v170
    %v189 = vpop.permute.xlu0 %188
    %v191 = vadd.f32 %v159, %v174
    %v192 = vadd.f32 %v160, %v174
    %v193 = vadd.f32 %v161, %v179
    %v194 = vadd.f32 %v162, %v179
    %v195 = vadd.f32 %v163, %v184
    %v196 = vadd.f32 %v164, %v184
    %v197 = vadd.f32 %v165, %v189
    %v198 = vadd.f32 %v166, %v189
    %v199 = vtanh.pop %v191
    %v200 = vtanh.pop %v192
    %v201 = vtanh.pop %v193
    %v202 = vtanh.pop %v194
    %v203 = vtanh.pop %v195
    %v204 = vtanh.pop %v196
    %v205 = vtanh.pop %v197
    %v206 = vtanh.pop %v198
    %v207 = vld [vmem:[%s5] sm:$0xff]
    %v208 = vld [vmem:[%s5 + $0x8] sm:$0xff]
    %v209 = vld [vmem:[%s5 + $0x10] sm:$0xff]
    %v210 = vld [vmem:[%s5 + $0x18] sm:$0xff]
    %v211 = vld [vmem:[%s6] sm:$0xff]
    %v212 = vld [vmem:[%s6 + $0x8] sm:$0xff]
    %v213 = vld [vmem:[%s6 + $0x10] sm:$0xff]
    %v214 = vld [vmem:[%s6 + $0x18] sm:$0xff]
    %216 = vset.pattern.permute.xlu0 0
    %217 = vperm.xlu0 %216, %v211
    %v218 = vpop.permute.xlu0 %217
    %221 = vset.pattern.permute.xlu0 0
    %222 = vperm.xlu0 %221, %v212
    %v223 = vpop.permute.xlu0 %222
    %226 = vset.pattern.permute.xlu0 0
    %227 = vperm.xlu0 %226, %v213
    %v228 = vpop.permute.xlu0 %227
    %231 = vset.pattern.permute.xlu0 0
    %232 = vperm.xlu0 %231, %v214
    %v233 = vpop.permute.xlu0 %232
    %vm235 = vcmask 261120
    %v237 = vsel %vm235, %v207, 0
    %v240 = vsel %vm235, %v208, 0
    %v243 = vsel %vm235, %v209, 0
    %v246 = vsel %vm235, %v210, 0
    %248 = vmatprep.subr.mxu0 %v200
    %249 = vmatpush1.msra.mxu0 %v199
    %250 = vmatprep.subr.mxu0 %v202
    %251 = vmatpush1.msra.mxu0 %v201
    %252 = vmatprep.subr.mxu0 %v204
    %253 = vmatpush1.msra.mxu0 %v203
    %254 = vmatprep.subr.mxu0 %v206
    %255 = vmatpush1.msra.mxu0 %v205
    %256 = vmatprep.subr.mxu0 0.0
    %257 = vmatpush1.msra.mxu0 0.0
    %258 = vmatprep.subr.mxu0 0.0
    %259 = vmatpush1.msra.mxu0 0.0
    %260 = vmatprep.subr.mxu0 0.0
    %261 = vmatpush1.msra.mxu0 0.0
    %262 = vmatprep.subr.mxu0 0.0
    %263 = vmatpush1.msra.mxu0 0.0
    %264 = vmatprep.subr.mxu0 0.0
    %265 = vmatpush1.msra.mxu0 0.0
    %266 = vmatprep.subr.mxu0 0.0
    %267 = vmatpush1.msra.mxu0 0.0
    %268 = vmatprep.subr.mxu0 0.0
    %269 = vmatpush1.msra.mxu0 0.0
    %270 = vmatprep.subr.mxu0 0.0
    %271 = vmatpush1.msra.mxu0 0.0
    %272 = vmatprep.subr.mxu0 0.0
    %273 = vmatpush1.msra.mxu0 0.0
    %274 = vmatprep.subr.mxu0 0.0
    %275 = vmatpush1.msra.mxu0 0.0
    %276 = vmatprep.subr.mxu0 0.0
    %277 = vmatpush1.msra.mxu0 0.0
    %278 = vmatprep.subr.mxu0 0.0
    %279 = vmatpush1.msra.mxu0 0.0
    %280 = vmatprep.subr.mxu0 0.0
    %281 = vmatpush1.msra.mxu0 0.0
    %282 = vmatprep.subr.mxu0 0.0
    %283 = vmatpush1.msra.mxu0 0.0
    %284 = vmatprep.subr.mxu0 0.0
    %285 = vmatpush1.msra.mxu0 0.0
    %286 = vmatprep.subr.mxu0 0.0
    %287 = vmatpush1.msra.mxu0 0.0
    %288 = vmatprep.subr.mxu0 0.0
    %289 = vmatpush1.msra.mxu0 0.0
    %290 = vmatprep.subr.mxu0 0.0
    %291 = vmatpush1.msra.mxu0 0.0
    %292 = vmatprep.subr.mxu0 0.0
    %293 = vmatpush1.msra.mxu0 0.0
    %294 = vmatprep.subr.mxu0 0.0
    %295 = vmatpush1.msra.mxu0 0.0
    %296 = vmatprep.subr.mxu0 0.0
    %297 = vmatpush1.msra.mxu0 0.0
    %298 = vmatprep.subr.mxu0 0.0
    %299 = vmatpush1.msra.mxu0 0.0
    %300 = vmatprep.subr.mxu0 0.0
    %301 = vmatpush1.msra.mxu0 0.0
    %302 = vmatprep.subr.mxu0 0.0
    %303 = vmatpush1.msra.mxu0 0.0
    %304 = vmatprep.subr.mxu0 0.0
    %305 = vmatpush1.msra.mxu0 0.0
    %306 = vmatprep.subr.mxu0 0.0
    %307 = vmatpush1.msra.mxu0 0.0
    %308 = vmatprep.subr.mxu0 0.0
    %309 = vmatpush1.msra.mxu0 0.0
    %310 = vmatprep.subr.mxu0 0.0
    %311 = vmatpush1.msra.mxu0 0.0
    %312 = vmatprep.mubr.f32.mxu0 0.0
    %313 = vmatmul.mubr.f32.gmra.mrb[0].mxu0 %v237
    %v314 = vpop.f32.mrb[0].mxu0
    %v315 = vadd.f32 %v218, %v314
    %v316 = vpop.f32.mrb[0].mxu0
    %v317 = vadd.f32 %v218, %v316
    %318 = vmatprep.mubr.f32.mxu0 0.0
    %319 = vmatmul.mubr.f32.gmra.mrb[0].mxu0 %v240
    %v320 = vpop.f32.mrb[0].mxu0
    %v321 = vadd.f32 %v223, %v320
    %v322 = vpop.f32.mrb[0].mxu0
    %v323 = vadd.f32 %v223, %v322
    %324 = vmatprep.mubr.f32.mxu0 0.0
    %325 = vmatmul.mubr.f32.gmra.mrb[0].mxu0 %v243
    %v326 = vpop.f32.mrb[0].mxu0
    %v327 = vadd.f32 %v228, %v326
    %v328 = vpop.f32.mrb[0].mxu0
    %v329 = vadd.f32 %v228, %v328
    %330 = vmatprep.mubr.f32.mxu0 0.0
    %331 = vmatmul.mubr.f32.gmra.mrb[0].mxu0 %v246
    %v332 = vpop.f32.mrb[0].mxu0
    %v333 = vadd.f32 %v233, %v332
    %v334 = vpop.f32.mrb[0].mxu0
    %v335 = vadd.f32 %v233, %v334
    %336 = vdwg.mxu0
    %v337 = vtanh.pop %v315
    %v338 = vtanh.pop %v317
    %v339 = vtanh.pop %v321
    %v340 = vtanh.pop %v323
    %v341 = vtanh.pop %v327
    %v342 = vtanh.pop %v329
    %v343 = vtanh.pop %v333
    %v344 = vtanh.pop %v335
    %v345 = vld [vmem:[%s7] sm:$0x1]
    %v346 = vld [vmem:[#allocation2] sm:$0x1]
    %348 = vset.pattern.permute.xlu0 0
    %349 = vperm.xlu0 %348, %v346
    %v350 = vpop.permute.xlu0 %349
    %v352 = vlaneseq
    %v353 = vshrl.u32 %v352, 7
    %v354 = vsub.s32 0, %v353
    %v355 = vrot.slane %v350, %v354
    %v357 = vsel %vm235, %v345, 0
    %359 = vmatprep.subr.mxu0 %v338
    %360 = vmatpush1.msra.mxu0 %v337
    %361 = vmatprep.subr.mxu0 %v340
    %362 = vmatpush1.msra.mxu0 %v339
    %363 = vmatprep.subr.mxu0 %v342
    %364 = vmatpush1.msra.mxu0 %v341
    %365 = vmatprep.subr.mxu0 %v344
    %366 = vmatpush1.msra.mxu0 %v343
    %367 = vmatprep.subr.mxu0 0.0
    %368 = vmatpush1.msra.mxu0 0.0
    %369 = vmatprep.subr.mxu0 0.0
    %370 = vmatpush1.msra.mxu0 0.0
    %371 = vmatprep.subr.mxu0 0.0
    %372 = vmatpush1.msra.mxu0 0.0
    %373 = vmatprep.subr.mxu0 0.0
    %374 = vmatpush1.msra.mxu0 0.0
    %375 = vmatprep.subr.mxu0 0.0
    %376 = vmatpush1.msra.mxu0 0.0
    %377 = vmatprep.subr.mxu0 0.0
    %378 = vmatpush1.msra.mxu0 0.0
    %379 = vmatprep.subr.mxu0 0.0
    %380 = vmatpush1.msra.mxu0 0.0
    %381 = vmatprep.subr.mxu0 0.0
    %382 = vmatpush1.msra.mxu0 0.0
    %383 = vmatprep.subr.mxu0 0.0
    %384 = vmatpush1.msra.mxu0 0.0
    %385 = vmatprep.subr.mxu0 0.0
    %386 = vmatpush1.msra.mxu0 0.0
    %387 = vmatprep.subr.mxu0 0.0
    %388 = vmatpush1.msra.mxu0 0.0
    %389 = vmatprep.subr.mxu0 0.0
    %390 = vmatpush1.msra.mxu0 0.0
    %391 = vmatprep.subr.mxu0 0.0
    %392 = vmatpush1.msra.mxu0 0.0
    %393 = vmatprep.subr.mxu0 0.0
    %394 = vmatpush1.msra.mxu0 0.0
    %395 = vmatprep.subr.mxu0 0.0
    %396 = vmatpush1.msra.mxu0 0.0
    %397 = vmatprep.subr.mxu0 0.0
    %398 = vmatpush1.msra.mxu0 0.0
    %399 = vmatprep.subr.mxu0 0.0
    %400 = vmatpush1.msra.mxu0 0.0
    %401 = vmatprep.subr.mxu0 0.0
    %402 = vmatpush1.msra.mxu0 0.0
    %403 = vmatprep.subr.mxu0 0.0
    %404 = vmatpush1.msra.mxu0 0.0
    %405 = vmatprep.subr.mxu0 0.0
    %406 = vmatpush1.msra.mxu0 0.0
    %407 = vmatprep.subr.mxu0 0.0
    %408 = vmatpush1.msra.mxu0 0.0
    %409 = vmatprep.subr.mxu0 0.0
    %410 = vmatpush1.msra.mxu0 0.0
    %411 = vmatprep.subr.mxu0 0.0
    %412 = vmatpush1.msra.mxu0 0.0
    %413 = vmatprep.subr.mxu0 0.0
    %414 = vmatpush1.msra.mxu0 0.0
    %415 = vmatprep.subr.mxu0 0.0
    %416 = vmatpush1.msra.mxu0 0.0
    %417 = vmatprep.subr.mxu0 0.0
    %418 = vmatpush1.msra.mxu0 0.0
    %419 = vmatprep.subr.mxu0 0.0
    %420 = vmatpush1.msra.mxu0 0.0
    %421 = vmatprep.subr.mxu0 0.0
    %422 = vmatpush1.msra.mxu0 0.0
    %423 = vmatprep.mubr.f32.mxu0 0.0
    %424 = vmatmul.mubr.f32.gmra.mrb[0].mxu0 %v357
    %v425 = vpop.f32.mrb[0].mxu0
    %v426 = vadd.f32 %v355, %v425
    %v427 = vpop.f32.mrb[0].mxu0
    %v428 = vadd.f32 %v355, %v427
    %429 = vdwg.mxu0
    %v430 = vtanh.pop %v426
    %v431 = vtanh.pop %v428
    %v434 = vcombine.low %v430, %v431
    %v436 = vunpack.c.l.s4 1966171168
    %v437 = vunpack.c.0.s8 %v436
    %v438 = vlaneseq
    %v439 = vshrl.u32 %v438, 7
    %v440 = vsub.s32 %v437, %v439
    %v441 = vrot.slane %v434, %v440
    %v443 = vunpack.c.l.s4 1966171168
    %v444 = vunpack.c.0.s8 %v443
    %v445 = vlaneseq
    %v446 = vshrl.u32 %v445, 7
    %v447 = vsub.s32 %v444, %v446
    %v448 = vrot.slane %v441, %v447
    %v450 = vlaneseq
    %vm451 = vcmp.ge.s32.totalorder %v450, 0
    %vm452 = vcmp.lt.s32.totalorder %v450, 256
    %vm453 = vmand %vm451, %vm452
    %454 = vst.msk [vmem:[#allocation3] sm:$0x3] %vm453, %v448
    // Predicated region
    $region38: #{tpu_custom_call.1} parent=1 // pred_check
      _
    $region39: #{tpu_custom_call.1} parent=1 // pred_check_branch
      %456 = sbr.rel (0) target = $region41
    $region40: #{tpu_custom_call.1} parent=1 // pred_region
      %s458 = ssub.s32 32, 32
      %459 = vsyncadd [#allocation4], %s458
      %s461 = sshll.u32 [#allocation3], 4
      %s462 = int_to_ptr.vmem [resolvable:$true] %s461
      %464 = dma.vmem_to_hbm [thread:$0]  %s462, 32, %s9, [#allocation4]
    $region41: #{tpu_custom_call.1} parent=1 // pred_fallthru
      _
    // Predicated region
    $region42: #{tpu_custom_call.1} parent=1 // pred_check
      _
    $region43: #{tpu_custom_call.1} parent=1 // pred_check_branch
      %466 = sbr.rel (0) target = $region45
    $region44: #{tpu_custom_call.1} parent=1 // pred_region
      %467 = dma.done [#allocation4], 32
    $region45: #{tpu_custom_call.1} parent=1 // pred_fallthru
      _
    %468 = vsyncpa [#allocation4], 1

</llo_original>
